<compile_context>
chip_gen: v5e
topology: v5e:2x2
jax: 0.10.0
libtpu: 0.0.40
codegen_flags: <defaults>
</compile_context>

<pallas_src>
import functools

import jax
import jax.numpy as jnp
from jax.experimental import pallas as pl
from jax.experimental.pallas import tpu as pltpu

_LANE = 128   # vreg lane width
_SUBLANE = 8  # vreg sublane height (f32)


def _round_up(n, m):
    return ((n + m - 1) // m) * m


def _mapping_net_kernel(x_ref, w1_ref, b1_ref, w2_ref, b2_ref, o_ref, *,
                        hid_chunk):
    """One batch tile: out = relu(x @ W1 + b1) @ W2 + b2, hidden chunked."""
    w_dtype = w1_ref.dtype
    # Cast the streamed tile to the MXU operand dtype on the VPU (no wrapper
    # pass over x in HBM). No-op when compute dtype == x dtype.
    x = x_ref[...].astype(w_dtype)
    b2 = b2_ref[...].astype(jnp.float32)

    hid_p = w1_ref.shape[1]
    y = None
    # Static Python loop over 128-aligned hidden chunks: keeps the f32
    # intermediate at (tb, hid_chunk) instead of (tb, hid_p).
    for c0 in range(0, hid_p, hid_chunk):
        c1 = min(c0 + hid_chunk, hid_p)
        b1_c = b1_ref[:, c0:c1].astype(jnp.float32)
        # fc1 chunk on the MXU with f32 accumulation; bias + ReLU on the VPU.
        h = jnp.dot(x, w1_ref[:, c0:c1],
                    preferred_element_type=jnp.float32) + b1_c
        h = jnp.maximum(h, 0.0)
        # fc2 chunk: cast the activation to the weight dtype for the MXU,
        # accumulate in f32.
        y_c = jnp.dot(h.astype(w_dtype), w2_ref[c0:c1, :],
                      preferred_element_type=jnp.float32)
        y = y_c if y is None else y + y_c

    # Single cast at the final (lane-dense, 128-padded) store.
    o_ref[...] = (y + b2).astype(o_ref.dtype)


def prepare_mapping_net_params(w1, b1, w2, b2, *, compute_dtype=jnp.bfloat16):
    """One-time preparation: pad feature dims to 128 lanes and cast the MXU
    operands. Call once and reuse the result across forward calls.

    w1: (input_dim, hidden_dim)   b1: (hidden_dim,) or (1, hidden_dim)
    w2: (hidden_dim, output_dim)  b2: (output_dim,) or (1, output_dim)

    compute_dtype: dtype of the MXU operands (x, W1, W2). bfloat16 (default)
      halves weight/x DMA bytes and uses the fast MXU path on v6e/v7x;
      accumulation and the bias+ReLU epilogue stay f32. Use jnp.float32 for an
      exact f32 forward.
    """
    in_dim, hid_dim = w1.shape
    out_dim = w2.shape[1]
    cdt = jnp.dtype(compute_dtype)

    in_p = _round_up(in_dim, _LANE)
    hid_p = _round_up(hid_dim, _LANE)
    out_p = _round_up(out_dim, _LANE)

    b1 = jnp.reshape(b1, (1, -1))
    b2 = jnp.reshape(b2, (1, -1))

    # Zero padding is exact: relu(0) = 0 and padded W2 rows / bias cols are 0.
    w1_p = jnp.zeros((in_p, hid_p), cdt).at[:in_dim, :hid_dim].set(
        w1.astype(cdt))
    b1_p = jnp.zeros((1, hid_p), jnp.float32).at[:, :hid_dim].set(
        b1.astype(jnp.float32))
    w2_p = jnp.zeros((hid_p, out_p), cdt).at[:hid_dim, :out_dim].set(
        w2.astype(cdt))
    b2_p = jnp.zeros((1, out_p), jnp.float32).at[:, :out_dim].set(
        b2.astype(jnp.float32))

    return {
        "w1": w1_p, "b1": b1_p, "w2": w2_p, "b2": b2_p,
        "in_dim": in_dim, "hid_dim": hid_dim, "out_dim": out_dim,
    }


def mapping_net_forward(x, params, *, block_batch=1024, hidden_block=512):
    """Fused MappingNet forward.

    x:      (B, input_dim) -- streamed per batch tile, never copied in HBM
            except an in_dim zero-pad when input_dim is not 128-aligned.
    params: output of prepare_mapping_net_params (padded + cast once).
    """
    w1_p, b1_p, w2_p, b2_p = params["w1"], params["b1"], params["w2"], params["b2"]
    in_dim, out_dim = params["in_dim"], params["out_dim"]

    B = x.shape[0]
    assert x.shape[1] == in_dim, "x feature dim does not match the weights"
    in_p, hid_p = w1_p.shape
    out_p = w2_p.shape[1]
    out_dtype = x.dtype

    # Only pad the contraction dim, and only when it is not 128-aligned
    # (zero pad is exact since W1's padded rows are zero too).
    x_in = x if in_p == in_dim else jnp.pad(x, ((0, 0), (0, in_p - in_dim)))

    # ---- Batch tile. Rows are a multiple of the sublane packing of the
    # narrowest dtype involved (8 for f32, 16 for bf16); sized so that there
    # are >=2 "parallel" grid steps whenever the batch allows it (megacore). --
    rows_mult = 32 // min(jnp.dtype(out_dtype).itemsize,
                          jnp.dtype(w1_p.dtype).itemsize)
    rows_mult = max(rows_mult, _SUBLANE)
    tb = min(block_batch, _round_up(pl.cdiv(B, 2), rows_mult))
    tb = max(rows_mult, _round_up(tb, rows_mult))
    if tb >= B:
        tb = B  # single full-extent block (full array dims are always legal)
    grid = (pl.cdiv(B, tb),)

    # Hidden chunk width (128-aligned) for the in-kernel intermediate.
    hid_chunk = min(_round_up(max(hidden_block, _LANE), _LANE), hid_p)

    # ---- VMEM budget: double-buffered streamed tiles + single-buffered
    # resident weights + f32 intermediates, with headroom. ----
    x_itemsize = jnp.dtype(x_in.dtype).itemsize
    o_itemsize = jnp.dtype(out_dtype).itemsize
    w_itemsize = jnp.dtype(w1_p.dtype).itemsize
    needed = (2 * tb * in_p * x_itemsize            # x tiles (2 buffers)
              + 2 * tb * out_p * o_itemsize         # out tiles (2 buffers)
              + (w1_p.size + w2_p.size) * w_itemsize  # weights (1 buffer)
              + (b1_p.size + b2_p.size) * 4           # biases (1 buffer)
              + tb * hid_chunk * 4                    # f32 hidden chunk
              + tb * out_p * 4)                       # f32 y accumulator
    vmem_limit = int(min(128 * 1024 * 1024,
                         max(32 * 1024 * 1024, int(needed * 1.5))))

    flops = 2 * B * (in_p * hid_p + hid_p * out_p)
    bytes_accessed = (x_in.size * x_itemsize
                      + (w1_p.size + w2_p.size) * w_itemsize
                      + (b1_p.size + b2_p.size) * 4
                      + B * out_p * o_itemsize)
    cost = pl.CostEstimate(flops=flops, transcendentals=0,
                           bytes_accessed=bytes_accessed)

    # Constant-index (grid-invariant) operands: single buffer is enough.
    resident = pl.Buffered(1)

    out_padded = pl.pallas_call(
        functools.partial(_mapping_net_kernel, hid_chunk=hid_chunk),
        out_shape=jax.ShapeDtypeStruct((B, out_p), out_dtype),
        grid_spec=pl.GridSpec(
            grid=grid,
            in_specs=[
                # x streamed per batch tile (partial last tile handled by
                # Pallas: out-of-range rows never reach the output slice).
                pl.BlockSpec((tb, in_p), lambda i: (i, 0)),
                # Weights / biases resident in VMEM across the whole grid.
                pl.BlockSpec((in_p, hid_p), lambda i: (0, 0),
                             pipeline_mode=resident),
                pl.BlockSpec((1, hid_p), lambda i: (0, 0),
                             pipeline_mode=resident),
                pl.BlockSpec((hid_p, out_p), lambda i: (0, 0),
                             pipeline_mode=resident),
                pl.BlockSpec((1, out_p), lambda i: (0, 0),
                             pipeline_mode=resident),
            ],
            out_specs=pl.BlockSpec((tb, out_p), lambda i: (i, 0)),
        ),
        compiler_params=pltpu.CompilerParams(
            dimension_semantics=("parallel",),
            vmem_limit_bytes=vmem_limit),
        cost_estimate=cost,
    )(x_in, w1_p, b1_p, w2_p, b2_p)

    return out_padded[:, :out_dim]


def init_mapping_net_params(key, input_dim, hidden_dim, output_dim,
                            dtype=jnp.float32):
    """PyTorch-style nn.Linear init: U(-1/sqrt(fan_in), 1/sqrt(fan_in)).
    Weights stored as (in_features, out_features)."""
    k1, k2, k3, k4 = jax.random.split(key, 4)
    bound1 = 1.0 / jnp.sqrt(input_dim)
    bound2 = 1.0 / jnp.sqrt(hidden_dim)
    w1 = jax.random.uniform(k1, (input_dim, hidden_dim), dtype, -bound1, bound1)
    b1 = jax.random.uniform(k2, (1, hidden_dim), dtype, -bound1, bound1)
    w2 = jax.random.uniform(k3, (hidden_dim, output_dim), dtype, -bound2, bound2)
    b2 = jax.random.uniform(k4, (1, output_dim), dtype, -bound2, bound2)
    return w1, b1, w2, b2


if __name__ == "__main__":
    key = jax.random.PRNGKey(0)
    kx, kp = jax.random.split(key)

    batch, input_dim, hidden_dim, output_dim = 8, 32, 64, 16
    x = jax.random.normal(kx, (batch, input_dim), jnp.float32)
    w1, b1, w2, b2 = init_mapping_net_params(kp, input_dim, hidden_dim,
                                             output_dim)
    ref = jnp.maximum(x @ w1 + b1, 0.0) @ w2 + b2

    # Exact f32 path (opt-in compute dtype), tight tolerance.
    params_f32 = prepare_mapping_net_params(w1, b1, w2, b2,
                                            compute_dtype=jnp.float32)
    out = jax.block_until_ready(mapping_net_forward(x, params_f32))
    assert out.shape == (batch, output_dim)
    assert jnp.allclose(out, ref, atol=1e-5, rtol=1e-5)

    # Default bf16 MXU-operand path (f32 accumulation), loose tolerance.
    params_bf16 = prepare_mapping_net_params(w1, b1, w2, b2)
    out_bf16 = jax.block_until_ready(mapping_net_forward(x, params_bf16))
    assert out_bf16.shape == (batch, output_dim)
    assert jnp.allclose(out_bf16.astype(jnp.float32), ref, atol=1e-1, rtol=1e-1)

    print("KERNEL_OK")
</pallas_src>

<mosaic_0001>
module attributes {stable_mosaic.version = 11 : i64} {
  func.func @_mapping_net_kernel(%arg0: i32, %arg1: memref<8x128xf32, #tpu.memory_space<vmem>>, %arg2: memref<128x128xf32, #tpu.memory_space<vmem>>, %arg3: memref<1x128xf32, #tpu.memory_space<vmem>>, %arg4: memref<128x128xf32, #tpu.memory_space<vmem>>, %arg5: memref<1x128xf32, #tpu.memory_space<vmem>>, %arg6: memref<8x128xf32, #tpu.memory_space<vmem>>) attributes {dimension_semantics = [#tpu.dimension_semantics<parallel>], iteration_bounds = array<i64: 1>, scalar_prefetch = 0 : i64, scratch_operands = 0 : i64, tpu.core_type = #tpu.core_type<tc>, window_params = [{transform_indices = @transform_0, window_bounds = array<i64: 8, 128>}, {pipeline_mode = #tpu.pipeline_mode<synchronous>, transform_indices = @transform_1, window_bounds = array<i64: 128, 128>}, {pipeline_mode = #tpu.pipeline_mode<synchronous>, transform_indices = @transform_2, window_bounds = array<i64: 1, 128>}, {pipeline_mode = #tpu.pipeline_mode<synchronous>, transform_indices = @transform_3, window_bounds = array<i64: 128, 128>}, {pipeline_mode = #tpu.pipeline_mode<synchronous>, transform_indices = @transform_4, window_bounds = array<i64: 1, 128>}, {transform_indices = @transform_5, window_bounds = array<i64: 8, 128>}]} {
    %c0 = arith.constant 0 : index
    %c0_0 = arith.constant 0 : index
    %0 = vector.load %arg1[%c0, %c0_0] : memref<8x128xf32, #tpu.memory_space<vmem>>, vector<8x128xf32>
    %c0_1 = arith.constant 0 : index
    %c0_2 = arith.constant 0 : index
    %1 = vector.load %arg5[%c0_1, %c0_2] : memref<1x128xf32, #tpu.memory_space<vmem>>, vector<1x128xf32>
    %c0_3 = arith.constant 0 : index
    %c0_4 = arith.constant 0 : index
    %2 = vector.load %arg3[%c0_3, %c0_4] : memref<1x128xf32, #tpu.memory_space<vmem>>, vector<1x128xf32>
    %c0_5 = arith.constant 0 : index
    %c0_6 = arith.constant 0 : index
    %3 = vector.load %arg2[%c0_5, %c0_6] : memref<128x128xf32, #tpu.memory_space<vmem>>, vector<128x128xf32>
    %cst = arith.constant dense<0.000000e+00> : vector<8x128xf32>
    %4 = tpu.matmul %0, %3, %cst {dimension_numbers = #tpu.dot_dimension_numbers<[1], [0], [0], [1], [0, 0, 1, 1], [], []>} : vector<8x128xf32>, vector<128x128xf32>, vector<8x128xf32> -> vector<8x128xf32>
    %5 = vector.broadcast %2 : vector<1x128xf32> to vector<8x128xf32>
    %6 = arith.addf %4, %5 : vector<8x128xf32>
    %cst_7 = arith.constant 0.000000e+00 : f32
    %7 = vector.broadcast %cst_7 : f32 to vector<8x128xf32>
    %8 = arith.maximumf %6, %7 : vector<8x128xf32>
    %c0_8 = arith.constant 0 : index
    %c0_9 = arith.constant 0 : index
    %9 = vector.load %arg4[%c0_8, %c0_9] : memref<128x128xf32, #tpu.memory_space<vmem>>, vector<128x128xf32>
    %cst_10 = arith.constant dense<0.000000e+00> : vector<8x128xf32>
    %10 = tpu.matmul %8, %9, %cst_10 {dimension_numbers = #tpu.dot_dimension_numbers<[1], [0], [0], [1], [0, 0, 1, 1], [], []>} : vector<8x128xf32>, vector<128x128xf32>, vector<8x128xf32> -> vector<8x128xf32>
    %11 = vector.broadcast %1 : vector<1x128xf32> to vector<8x128xf32>
    %12 = arith.addf %10, %11 : vector<8x128xf32>
    %c0_11 = arith.constant 0 : index
    %c0_12 = arith.constant 0 : index
    %13 = vector.load %arg6[%c0_11, %c0_12] : memref<8x128xf32, #tpu.memory_space<vmem>>, vector<8x128xf32>
    tpu.vector_store %arg6[%c0_11, %c0_12], %12 {strides = array<i32>} : memref<8x128xf32, #tpu.memory_space<vmem>>, vector<8x128xf32>,
    return
  }
  func.func @transform_0(%arg0: i32) -> (i32, i32) {
    %c0_i32 = arith.constant 0 : i32
    %c0_i32_0 = arith.constant 0 : i32
    return %arg0, %c0_i32 : i32, i32
  }
  func.func @transform_1(%arg0: i32) -> (i32, i32) {
    %c0_i32 = arith.constant 0 : i32
    %c0_i32_0 = arith.constant 0 : i32
    %c0_i32_1 = arith.constant 0 : i32
    return %c0_i32, %c0_i32_0 : i32, i32
  }
  func.func @transform_2(%arg0: i32) -> (i32, i32) {
    %c0_i32 = arith.constant 0 : i32
    %c0_i32_0 = arith.constant 0 : i32
    %c0_i32_1 = arith.constant 0 : i32
    return %c0_i32, %c0_i32_0 : i32, i32
  }
  func.func @transform_3(%arg0: i32) -> (i32, i32) {
    %c0_i32 = arith.constant 0 : i32
    %c0_i32_0 = arith.constant 0 : i32
    %c0_i32_1 = arith.constant 0 : i32
    return %c0_i32, %c0_i32_0 : i32, i32
  }
  func.func @transform_4(%arg0: i32) -> (i32, i32) {
    %c0_i32 = arith.constant 0 : i32
    %c0_i32_0 = arith.constant 0 : i32
    %c0_i32_1 = arith.constant 0 : i32
    return %c0_i32, %c0_i32_0 : i32, i32
  }
  func.func @transform_5(%arg0: i32) -> (i32, i32) {
    %c0_i32 = arith.constant 0 : i32
    %c0_i32_0 = arith.constant 0 : i32
    return %arg0, %c0_i32 : i32, i32
  }
}

</mosaic_0001>

<llo_original>
// kernel: tpu_custom_call.1
$region0: #{tpu_custom_call.1}
  #allocation0 [shape = 'u32[]', space=smem, size = 0x4, offset = 0x4, fixed_abs, tag = 'smem constant byte address 0x4 - core index']
  #allocation1 [shape = 'u32[72,128]{1,0:T(1,128)}', space=vmem, size = 0x9000, scoped, tag = 'internal scratch']
  %s0 = inlined_call_operand.hbm [shape: f32[8,128], index: 0, kind: input, shape index: {}]
  %s1 = inlined_call_operand.hbm [shape: f32[128,128], index: 1, kind: input, shape index: {}]
  %s2 = inlined_call_operand.vmem [shape: f32[1,128], index: 2, kind: input, shape index: {}]
  %s3 = inlined_call_operand.hbm [shape: f32[128,128], index: 3, kind: input, shape index: {}]
  %s4 = inlined_call_operand.vmem [shape: f32[1,128], index: 4, kind: input, shape index: {}]
  %s5 = inlined_call_operand.hbm [shape: f32[8,128], index: 5, kind: output, shape index: {}]
  %s6 = sld [smem:[#allocation0]]
  $region42: #{tpu_custom_call.1} parent=0
    _
  %s8 = ssub.s32 1, %s6
  %s9 = scalar_select 0, %s8, %s6
  $region1: #{tpu_custom_call.1} parent=0
    #allocation2 [shape = 'u8[4096]{0}', space=vmem, size = 0x1000, scoped, tag = 'input window, operand 0, single buffered']
    #allocation3 [shape = 's32[1]{0}', space=sflag, size = 0x4, scoped, tag = 'scoped memory for tpu_custom_call.1']
    #allocation4 [shape = 's32[1]{0}', space=sflag, size = 0x4, scoped, tag = 'scoped memory for tpu_custom_call.1']
    #allocation5 [shape = 'u8[65536]{0}', space=vmem, size = 0x10000, scoped, tag = 'input window, operand 1, single buffered']
    #allocation6 [shape = 's32[1]{0}', space=sflag, size = 0x4, scoped, tag = 'scoped memory for tpu_custom_call.1']
    #allocation7 [shape = 'u8[65536]{0}', space=vmem, size = 0x10000, scoped, tag = 'input window, operand 3, single buffered']
    #allocation8 [shape = 'u8[4096]{0}', space=vmem, size = 0x1000, scoped, tag = 'output window, operand 0, single buffered']
    %10 = vsyncpa [#allocation3], 0
    %11 = vsyncpa [#allocation6], 0
    %12 = vsyncpa [#allocation4], 0
    // Predicated region
    $region2: #{tpu_custom_call.1} parent=1 // pred_check
      _
    $region3: #{tpu_custom_call.1} parent=1 // pred_check_branch
      %14 = sbr.rel (0) target = $region5
    $region4: #{tpu_custom_call.1} parent=1 // pred_region
      %16 = vsyncadd [#allocation3], 0
      %s18 = sshll.u32 %s0, 4
      %s19 = int_to_ptr.hbm [resolvable:$true] %s18
      %s20 = sshll.u32 [#allocation2], 4
      %s21 = int_to_ptr.vmem [resolvable:$true] %s20
      %23 = dma.hbm_to_vmem [thread:$0]  %s19, 128, %s21, [#allocation3]
    $region5: #{tpu_custom_call.1} parent=1 // pred_fallthru
      _
    // Predicated region
    $region6: #{tpu_custom_call.1} parent=1 // pred_check
      _
    $region7: #{tpu_custom_call.1} parent=1 // pred_check_branch
      %25 = sbr.rel (0) target = $region9
    $region8: #{tpu_custom_call.1} parent=1 // pred_region
      %27 = vsyncadd [#allocation6], 0
      %s28 = sshll.u32 %s1, 4
      %s29 = int_to_ptr.hbm [resolvable:$true] %s28
      %s30 = sshll.u32 [#allocation5], 4
      %s31 = int_to_ptr.vmem [resolvable:$true] %s30
      %36 = dma.hbm_to_vmem [thread:$0]  %s29, 2048, %s31, [#allocation6], 128, 128, 8
    $region9: #{tpu_custom_call.1} parent=1 // pred_fallthru
      _
    // Predicated region
    $region10: #{tpu_custom_call.1} parent=1 // pred_check
      _
    $region11: #{tpu_custom_call.1} parent=1 // pred_check_branch
      %38 = sbr.rel (0) target = $region13
    $region12: #{tpu_custom_call.1} parent=1 // pred_region
      _
    $region13: #{tpu_custom_call.1} parent=1 // pred_fallthru
      _
    // Predicated region
    $region14: #{tpu_custom_call.1} parent=1 // pred_check
      _
    $region15: #{tpu_custom_call.1} parent=1 // pred_check_branch
      %40 = sbr.rel (0) target = $region17
    $region16: #{tpu_custom_call.1} parent=1 // pred_region
      %42 = vsyncadd [#allocation6], 0
      %s43 = sshll.u32 %s3, 4
      %s44 = int_to_ptr.hbm [resolvable:$true] %s43
      %s45 = sshll.u32 [#allocation7], 4
      %s46 = int_to_ptr.vmem [resolvable:$true] %s45
      %51 = dma.hbm_to_vmem [thread:$0]  %s44, 2048, %s46, [#allocation6], 128, 128, 8
    $region17: #{tpu_custom_call.1} parent=1 // pred_fallthru
      _
    // Predicated region
    $region18: #{tpu_custom_call.1} parent=1 // pred_check
      _
    $region19: #{tpu_custom_call.1} parent=1 // pred_check_branch
      %53 = sbr.rel (0) target = $region21
    $region20: #{tpu_custom_call.1} parent=1 // pred_region
      _
    $region21: #{tpu_custom_call.1} parent=1 // pred_fallthru
      _
    // Predicated region
    $region22: #{tpu_custom_call.1} parent=1 // pred_check
      _
    $region23: #{tpu_custom_call.1} parent=1 // pred_check_branch
      %55 = sbr.rel (0) target = $region25
    $region24: #{tpu_custom_call.1} parent=1 // pred_region
      %57 = dma.done [#allocation3], 128
    $region25: #{tpu_custom_call.1} parent=1 // pred_fallthru
      _
    // Predicated region
    $region26: #{tpu_custom_call.1} parent=1 // pred_check
      _
    $region27: #{tpu_custom_call.1} parent=1 // pred_check_branch
      %59 = sbr.rel (0) target = $region29
    $region28: #{tpu_custom_call.1} parent=1 // pred_region
      %61 = dma.done [#allocation6], 2048
    $region29: #{tpu_custom_call.1} parent=1 // pred_fallthru
      _
    // Predicated region
    $region30: #{tpu_custom_call.1} parent=1 // pred_check
      _
    $region31: #{tpu_custom_call.1} parent=1 // pred_check_branch
      %63 = sbr.rel (0) target = $region33
    $region32: #{tpu_custom_call.1} parent=1 // pred_region
      %65 = dma.done [#allocation6], 2048
    $region33: #{tpu_custom_call.1} parent=1 // pred_fallthru
      _
    %v66 = vld [vmem:[#allocation2] sm:$0xff]
    %v67 = vld [vmem:[%s4] sm:$0x1]
    %v68 = vld [vmem:[%s2] sm:$0x1]
    %v69 = vld [vmem:[#allocation5] sm:$0xff]
    %v70 = vld [vmem:[#allocation5 + $0x8] sm:$0xff]
    %v71 = vld [vmem:[#allocation5 + $0x10] sm:$0xff]
    %v72 = vld [vmem:[#allocation5 + $0x18] sm:$0xff]
    %v73 = vld [vmem:[#allocation5 + $0x20] sm:$0xff]
    %v74 = vld [vmem:[#allocation5 + $0x28] sm:$0xff]
    %v75 = vld [vmem:[#allocation5 + $0x30] sm:$0xff]
    %v76 = vld [vmem:[#allocation5 + $0x38] sm:$0xff]
    %v77 = vld [vmem:[#allocation5 + $0x40] sm:$0xff]
    %v78 = vld [vmem:[#allocation5 + $0x48] sm:$0xff]
    %v79 = vld [vmem:[#allocation5 + $0x50] sm:$0xff]
    %v80 = vld [vmem:[#allocation5 + $0x58] sm:$0xff]
    %v81 = vld [vmem:[#allocation5 + $0x60] sm:$0xff]
    %v82 = vld [vmem:[#allocation5 + $0x68] sm:$0xff]
    %v83 = vld [vmem:[#allocation5 + $0x70] sm:$0xff]
    %v84 = vld [vmem:[#allocation5 + $0x78] sm:$0xff]
    %v86 = vperm.slane %v68, 0
    %88 = vmatpush.msra.mxu0 %v84
    %89 = vmatpush.msra.mxu0 %v83
    %90 = vmatpush.msra.mxu0 %v82
    %91 = vmatpush.msra.mxu0 %v81
    %92 = vmatpush.msra.mxu0 %v80
    %93 = vmatpush.msra.mxu0 %v79
    %94 = vmatpush.msra.mxu0 %v78
    %95 = vmatpush.msra.mxu0 %v77
    %96 = vmatpush.msra.mxu0 %v76
    %97 = vmatpush.msra.mxu0 %v75
    %98 = vmatpush.msra.mxu0 %v74
    %99 = vmatpush.msra.mxu0 %v73
    %100 = vmatpush.msra.mxu0 %v72
    %101 = vmatpush.msra.mxu0 %v71
    %102 = vmatpush.msra.mxu0 %v70
    %103 = vmatpush.msra.mxu0 %v69
    %104 = vmatmul.f32.gmra.mxu0 %v66
    %v105 = vpop.f32.mrf.mxu0
    %v106 = vadd.f32 %v86, %v105
    %107 = vdwg.mxu0
    %v108 = vmax.f32 %v106, 0.0
    %v109 = vld [vmem:[#allocation7] sm:$0xff]
    %v110 = vld [vmem:[#allocation7 + $0x8] sm:$0xff]
    %v111 = vld [vmem:[#allocation7 + $0x10] sm:$0xff]
    %v112 = vld [vmem:[#allocation7 + $0x18] sm:$0xff]
    %v113 = vld [vmem:[#allocation7 + $0x20] sm:$0xff]
    %v114 = vld [vmem:[#allocation7 + $0x28] sm:$0xff]
    %v115 = vld [vmem:[#allocation7 + $0x30] sm:$0xff]
    %v116 = vld [vmem:[#allocation7 + $0x38] sm:$0xff]
    %v117 = vld [vmem:[#allocation7 + $0x40] sm:$0xff]
    %v118 = vld [vmem:[#allocation7 + $0x48] sm:$0xff]
    %v119 = vld [vmem:[#allocation7 + $0x50] sm:$0xff]
    %v120 = vld [vmem:[#allocation7 + $0x58] sm:$0xff]
    %v121 = vld [vmem:[#allocation7 + $0x60] sm:$0xff]
    %v122 = vld [vmem:[#allocation7 + $0x68] sm:$0xff]
    %v123 = vld [vmem:[#allocation7 + $0x70] sm:$0xff]
    %v124 = vld [vmem:[#allocation7 + $0x78] sm:$0xff]
    %v126 = vperm.slane %v67, 0
    %128 = vmatpush.msra.mxu0 %v124
    %129 = vmatpush.msra.mxu0 %v123
    %130 = vmatpush.msra.mxu0 %v122
    %131 = vmatpush.msra.mxu0 %v121
    %132 = vmatpush.msra.mxu0 %v120
    %133 = vmatpush.msra.mxu0 %v119
    %134 = vmatpush.msra.mxu0 %v118
    %135 = vmatpush.msra.mxu0 %v117
    %136 = vmatpush.msra.mxu0 %v116
    %137 = vmatpush.msra.mxu0 %v115
    %138 = vmatpush.msra.mxu0 %v114
    %139 = vmatpush.msra.mxu0 %v113
    %140 = vmatpush.msra.mxu0 %v112
    %141 = vmatpush.msra.mxu0 %v111
    %142 = vmatpush.msra.mxu0 %v110
    %143 = vmatpush.msra.mxu0 %v109
    %144 = vmatmul.f32.gmra.mxu0 %v108
    %v145 = vpop.f32.mrf.mxu0
    %v146 = vadd.f32 %v126, %v145
    %147 = vdwg.mxu0
    %148 = vst [vmem:[#allocation8] sm:$0xff] %v146
    // Predicated region
    $region34: #{tpu_custom_call.1} parent=1 // pred_check
      _
    $region35: #{tpu_custom_call.1} parent=1 // pred_check_branch
      %150 = sbr.rel (0) target = $region37
    $region36: #{tpu_custom_call.1} parent=1 // pred_region
      %152 = vsyncadd [#allocation4], 0
      %s154 = sshll.u32 [#allocation8], 4
      %s155 = int_to_ptr.vmem [resolvable:$true] %s154
      %s156 = sshll.u32 %s5, 4
      %s157 = int_to_ptr.hbm [resolvable:$true] %s156
      %159 = dma.vmem_to_hbm [thread:$0]  %s155, 128, %s157, [#allocation4]
    $region37: #{tpu_custom_call.1} parent=1 // pred_fallthru
      _
    // Predicated region
    $region38: #{tpu_custom_call.1} parent=1 // pred_check
      _
    $region39: #{tpu_custom_call.1} parent=1 // pred_check_branch
      %161 = sbr.rel (0) target = $region41
    $region40: #{tpu_custom_call.1} parent=1 // pred_region
      %163 = dma.done [#allocation4], 128
    $region41: #{tpu_custom_call.1} parent=1 // pred_fallthru
      _
    %164 = vsyncpa [#allocation3], 1
    %165 = vsyncpa [#allocation6], 1
    %166 = vsyncpa [#allocation4], 1

</llo_original>
